<compile_context>
chip_gen: v7x
topology: tpu7x:2x2x1
jax: 0.10.0
libtpu: 0.0.40
codegen_flags: <defaults>
</compile_context>

<pallas_src>
import jax
import jax.numpy as jnp
from jax.experimental import pallas as pl
from jax.experimental.pallas import tpu as pltpu

NEG_SLOPE = 0.01   # torch.nn.LeakyReLU default negative_slope
F_IN = 192         # input features
LANE = 128         # padded (lane-dense) width of hidden-layer outputs
OUT_PAD = 8        # output array lane width (>= 6, last-dim = full array dim)
OUT_F = 6          # real number of outputs


def _leaky_relu(x):
    return jnp.where(x > 0, x, NEG_SLOPE * x)


def bbox_head_kernel(x_ref, w1_ref, b1_ref, w2_ref, b2_ref, w3_ref, b3_ref,
                     o_ref):
    """Fused 3-layer MLP on one row-tile of the flattened input."""
    cdt = w1_ref.dtype   # MXU operand dtype (bf16 or f32); accumulation is f32

    # In-kernel cast of the activation tile (no extra HBM round trip).
    x = x_ref[...].astype(cdt)

    h = jnp.dot(x, w1_ref[...], preferred_element_type=jnp.float32)
    h = _leaky_relu(h + b1_ref[...])                       # (tm, 128) f32

    h = jnp.dot(h.astype(cdt), w2_ref[...], preferred_element_type=jnp.float32)
    h = _leaky_relu(h + b2_ref[...])                       # (tm, 128) f32

    h = jnp.dot(h.astype(cdt), w3_ref[...], preferred_element_type=jnp.float32)
    h = jax.nn.sigmoid(h + b3_ref[...])                    # (tm, 128) f32

    # Only the first 8 lanes are written back (lanes 6,7 hold sigmoid(0)=0.5
    # from zero padding and are sliced off in the wrapper).
    o_ref[...] = h[:, :OUT_PAD].astype(o_ref.dtype)


def prepare_params(params, compute_dtype=jnp.bfloat16):
    """One-time prep: zero-pad weights to MXU-friendly shapes and cast.

    params: dict with w1 (192,96), b1 (96,), w2 (96,24), b2 (24,), w3 (24,6),
            b3 (6,).  Weights are laid out (in, out), i.e. the TRANSPOSE of
            PyTorch nn.Linear.weight -- callers exporting torch params must
            transpose them.

    Zero padding is mathematically exact: padded input lanes are multiplied
    by zero weights, padded bias lanes are 0, so hidden pad lanes stay 0.
    Call this once at param-load time, NOT per forward call.
    """
    wdt = jnp.dtype(compute_dtype)
    w1 = jnp.pad(params["w1"], ((0, 0), (0, LANE - 96))).astype(wdt)
    w2 = jnp.pad(params["w2"], ((0, LANE - 96), (0, LANE - 24))).astype(wdt)
    w3 = jnp.pad(params["w3"], ((0, LANE - 24), (0, LANE - OUT_F))).astype(wdt)
    b1 = jnp.pad(params["b1"], (0, LANE - 96)).reshape(1, LANE).astype(jnp.float32)
    b2 = jnp.pad(params["b2"], (0, LANE - 24)).reshape(1, LANE).astype(jnp.float32)
    b3 = jnp.pad(params["b3"], (0, LANE - OUT_F)).reshape(1, LANE).astype(jnp.float32)
    return dict(w1=w1, b1=b1, w2=w2, b2=b2, w3=w3, b3=b3)


def bounding_box_head(x, prepared, *, row_tile=4096):
    """
    x:        (batch, instances, 192), any float dtype (kept as-is in HBM).
    prepared: output of prepare_params().
    returns:  (batch, instances, 6) in x.dtype.
    """
    B, I, F = x.shape
    assert F == F_IN, "BoundingBoxHead expects 192 input features"
    n_rows = B * I
    out_dtype = x.dtype

    x2 = x.reshape(n_rows, F)                      # contiguous view, no copy
    w1, b1 = prepared["w1"], prepared["b1"]
    w2, b2 = prepared["w2"], prepared["b2"]
    w3, b3 = prepared["w3"], prepared["b3"]
    wdt = w1.dtype

    # Row tile: big (amortize ~0.35us/step), but >=2 grid steps when there is
    # enough work so v7x's two TensorCores both get rows; 16-sublane aligned
    # (bf16 packs two rows per sublane).  No host-side padding of x: the grid
    # is a ceiling divide and Pallas masks the ragged last block.
    tile = min(row_tile, n_rows)
    if n_rows >= 2048:
        tile = min(tile, pl.cdiv(n_rows, 2))
    tile = max(16, ((tile + 15) // 16) * 16)
    grid = (pl.cdiv(n_rows, tile),)

    const = lambda shape: pl.BlockSpec(shape, lambda i: (0, 0))

    cost = pl.CostEstimate(
        flops=2 * n_rows * (F_IN * LANE + LANE * LANE + LANE * LANE),
        transcendentals=2 * n_rows * LANE,            # sigmoid exp + recip
        bytes_accessed=(n_rows * F_IN * x2.dtype.itemsize
                        + n_rows * OUT_PAD * jnp.dtype(out_dtype).itemsize
                        + (F_IN + 2 * LANE) * LANE * jnp.dtype(wdt).itemsize
                        + 3 * LANE * 4),
    )

    out = pl.pallas_call(
        bbox_head_kernel,
        out_shape=jax.ShapeDtypeStruct((n_rows, OUT_PAD), out_dtype),
        grid_spec=pltpu.PrefetchScalarGridSpec(
            num_scalar_prefetch=0,
            grid=grid,
            in_specs=[
                pl.BlockSpec((tile, F_IN), lambda i: (i, 0)),   # x row tile
                const(w1.shape), const(b1.shape),               # VMEM-resident
                const(w2.shape), const(b2.shape),               # (constant
                const(w3.shape), const(b3.shape),               #  index maps)
            ],
            out_specs=pl.BlockSpec((tile, OUT_PAD), lambda i: (i, 0)),
        ),
        compiler_params=pltpu.CompilerParams(
            dimension_semantics=("parallel",)),   # megacore-shardable on v7x
        cost_estimate=cost,
    )(x2, w1, b1, w2, b2, w3, b3)

    return out[:, :OUT_F].reshape(B, I, OUT_F)


def init_params(key):
    """Deterministic synthetic parameters, already transposed to (in, out)."""
    ks = jax.random.split(key, 6)

    def linear(kw, kb, fan_in, fan_out):
        bound = 1.0 / jnp.sqrt(fan_in)      # torch-default-like uniform init
        w = jax.random.uniform(kw, (fan_in, fan_out), jnp.float32,
                               minval=-bound, maxval=bound)
        b = jax.random.uniform(kb, (fan_out,), jnp.float32,
                               minval=-bound, maxval=bound)
        return w, b

    w1, b1 = linear(ks[0], ks[1], 192, 96)
    w2, b2 = linear(ks[2], ks[3], 96, 24)
    w3, b3 = linear(ks[4], ks[5], 24, 6)
    return dict(w1=w1, b1=b1, w2=w2, b2=b2, w3=w3, b3=b3)


def _reference(x, p):
    h = x @ p["w1"] + p["b1"]
    h = jnp.where(h > 0, h, NEG_SLOPE * h)
    h = h @ p["w2"] + p["b2"]
    h = jnp.where(h > 0, h, NEG_SLOPE * h)
    h = h @ p["w3"] + p["b3"]
    return jax.nn.sigmoid(h)


if __name__ == "__main__":
    key = jax.random.PRNGKey(0)
    kx, kp = jax.random.split(key)

    batch, instances = 2, 128
    x = jax.random.normal(kx, (batch, instances, F_IN), jnp.float32)
    params = init_params(kp)
    ref = _reference(x, params)

    # Padded / pre-cast weights are prepared once (hoisted out of call path).
    prep_bf16 = prepare_params(params, compute_dtype=jnp.bfloat16)
    prep_f32 = prepare_params(params, compute_dtype=jnp.float32)

    # 1) default: bf16 MXU operands (in-kernel x cast), f32 accumulation,
    #    narrow 8-lane output, single fat row tile.
    out = jax.block_until_ready(bounding_box_head(x, prep_bf16))
    assert out.shape == (batch, instances, OUT_F)
    assert jnp.allclose(out, ref, atol=3e-2), "bf16 mismatch"

    # 2) f32 operand path: exact check.
    out_f32 = jax.block_until_ready(bounding_box_head(x, prep_f32))
    assert jnp.allclose(out_f32, ref, atol=1e-5, rtol=1e-5), "f32 mismatch"

    # 3) multi-step ragged grid (256 rows, tile 48 -> 6 steps, last partial):
    #    checks VMEM-resident weights across steps + masked ragged block.
    out_tiled = jax.block_until_ready(
        bounding_box_head(x, prep_f32, row_tile=48))
    assert jnp.allclose(out_tiled, ref, atol=1e-5, rtol=1e-5), "tiled mismatch"

    print("KERNEL_OK")
</pallas_src>

<mosaic_0001>
module attributes {stable_mosaic.version = 11 : i64} {
  func.func @bbox_head_kernel(%arg0: i32, %arg1: memref<256x192xf32, #tpu.memory_space<vmem>>, %arg2: memref<192x128xbf16, #tpu.memory_space<vmem>>, %arg3: memref<1x128xf32, #tpu.memory_space<vmem>>, %arg4: memref<128x128xbf16, #tpu.memory_space<vmem>>, %arg5: memref<1x128xf32, #tpu.memory_space<vmem>>, %arg6: memref<128x128xbf16, #tpu.memory_space<vmem>>, %arg7: memref<1x128xf32, #tpu.memory_space<vmem>>, %arg8: memref<256x8xf32, #tpu.memory_space<vmem>>) attributes {dimension_semantics = [#tpu.dimension_semantics<parallel>], iteration_bounds = array<i64: 1>, scalar_prefetch = 0 : i64, scratch_operands = 0 : i64, tpu.core_type = #tpu.core_type<tc>, window_params = [{transform_indices = @transform_0, window_bounds = array<i64: 256, 192>}, {pipeline_mode = #tpu.pipeline_mode<synchronous>, transform_indices = @transform_1, window_bounds = array<i64: 192, 128>}, {pipeline_mode = #tpu.pipeline_mode<synchronous>, transform_indices = @transform_2, window_bounds = array<i64: 1, 128>}, {pipeline_mode = #tpu.pipeline_mode<synchronous>, transform_indices = @transform_3, window_bounds = array<i64: 128, 128>}, {pipeline_mode = #tpu.pipeline_mode<synchronous>, transform_indices = @transform_4, window_bounds = array<i64: 1, 128>}, {pipeline_mode = #tpu.pipeline_mode<synchronous>, transform_indices = @transform_5, window_bounds = array<i64: 128, 128>}, {pipeline_mode = #tpu.pipeline_mode<synchronous>, transform_indices = @transform_6, window_bounds = array<i64: 1, 128>}, {transform_indices = @transform_7, window_bounds = array<i64: 256, 8>}]} {
    %c0 = arith.constant 0 : index
    %c0_0 = arith.constant 0 : index
    %0 = vector.load %arg1[%c0, %c0_0] : memref<256x192xf32, #tpu.memory_space<vmem>>, vector<256x192xf32>
    %1 = arith.truncf %0 : vector<256x192xf32> to vector<256x192xbf16>
    %c0_1 = arith.constant 0 : index
    %c0_2 = arith.constant 0 : index
    %2 = vector.load %arg2[%c0_1, %c0_2] : memref<192x128xbf16, #tpu.memory_space<vmem>>, vector<192x128xbf16>
    %cst = arith.constant dense<0.000000e+00> : vector<256x128xf32>
    %3 = tpu.matmul %1, %2, %cst {dimension_numbers = #tpu.dot_dimension_numbers<[1], [0], [0], [1], [0, 0, 1, 1], [], []>} : vector<256x192xbf16>, vector<192x128xbf16>, vector<256x128xf32> -> vector<256x128xf32>
    %c0_3 = arith.constant 0 : index
    %c0_4 = arith.constant 0 : index
    %4 = vector.load %arg3[%c0_3, %c0_4] : memref<1x128xf32, #tpu.memory_space<vmem>>, vector<1x128xf32>
    %5 = vector.broadcast %4 : vector<1x128xf32> to vector<256x128xf32>
    %6 = arith.addf %3, %5 : vector<256x128xf32>
    %cst_5 = arith.constant 0.000000e+00 : f32
    %7 = vector.broadcast %cst_5 : f32 to vector<256x128xf32>
    %8 = arith.cmpf ogt, %6, %7 : vector<256x128xf32>
    %cst_6 = arith.constant 0.00999999977 : f32
    %9 = vector.broadcast %cst_6 : f32 to vector<256x128xf32>
    %10 = arith.mulf %9, %6 : vector<256x128xf32>
    %11 = arith.select %8, %6, %10 : vector<256x128xi1>, vector<256x128xf32>
    %12 = arith.truncf %11 : vector<256x128xf32> to vector<256x128xbf16>
    %c0_7 = arith.constant 0 : index
    %c0_8 = arith.constant 0 : index
    %13 = vector.load %arg4[%c0_7, %c0_8] : memref<128x128xbf16, #tpu.memory_space<vmem>>, vector<128x128xbf16>
    %cst_9 = arith.constant dense<0.000000e+00> : vector<256x128xf32>
    %14 = tpu.matmul %12, %13, %cst_9 {dimension_numbers = #tpu.dot_dimension_numbers<[1], [0], [0], [1], [0, 0, 1, 1], [], []>} : vector<256x128xbf16>, vector<128x128xbf16>, vector<256x128xf32> -> vector<256x128xf32>
    %c0_10 = arith.constant 0 : index
    %c0_11 = arith.constant 0 : index
    %15 = vector.load %arg5[%c0_10, %c0_11] : memref<1x128xf32, #tpu.memory_space<vmem>>, vector<1x128xf32>
    %16 = vector.broadcast %15 : vector<1x128xf32> to vector<256x128xf32>
    %17 = arith.addf %14, %16 : vector<256x128xf32>
    %cst_12 = arith.constant 0.000000e+00 : f32
    %18 = vector.broadcast %cst_12 : f32 to vector<256x128xf32>
    %19 = arith.cmpf ogt, %17, %18 : vector<256x128xf32>
    %cst_13 = arith.constant 0.00999999977 : f32
    %20 = vector.broadcast %cst_13 : f32 to vector<256x128xf32>
    %21 = arith.mulf %20, %17 : vector<256x128xf32>
    %22 = arith.select %19, %17, %21 : vector<256x128xi1>, vector<256x128xf32>
    %23 = arith.truncf %22 : vector<256x128xf32> to vector<256x128xbf16>
    %c0_14 = arith.constant 0 : index
    %c0_15 = arith.constant 0 : index
    %24 = vector.load %arg6[%c0_14, %c0_15] : memref<128x128xbf16, #tpu.memory_space<vmem>>, vector<128x128xbf16>
    %cst_16 = arith.constant dense<0.000000e+00> : vector<256x128xf32>
    %25 = tpu.matmul %23, %24, %cst_16 {dimension_numbers = #tpu.dot_dimension_numbers<[1], [0], [0], [1], [0, 0, 1, 1], [], []>} : vector<256x128xbf16>, vector<128x128xbf16>, vector<256x128xf32> -> vector<256x128xf32>
    %c0_17 = arith.constant 0 : index
    %c0_18 = arith.constant 0 : index
    %26 = vector.load %arg7[%c0_17, %c0_18] : memref<1x128xf32, #tpu.memory_space<vmem>>, vector<1x128xf32>
    %27 = vector.broadcast %26 : vector<1x128xf32> to vector<256x128xf32>
    %28 = arith.addf %25, %27 : vector<256x128xf32>
    %29 = arith.negf %28 : vector<256x128xf32>
    %30 = math.exp %29 : vector<256x128xf32>
    %cst_19 = arith.constant 1.000000e+00 : f32
    %31 = vector.broadcast %cst_19 : f32 to vector<256x128xf32>
    %32 = arith.addf %31, %30 : vector<256x128xf32>
    %33 = arith.divf %31, %32 : vector<256x128xf32>
    %34 = vector.extract_strided_slice %33 {offsets = [0, 0], sizes = [256, 8], strides = [1, 1]} : vector<256x128xf32> to vector<256x8xf32>
    %c0_20 = arith.constant 0 : index
    %c0_21 = arith.constant 0 : index
    %35 = vector.load %arg8[%c0_20, %c0_21] : memref<256x8xf32, #tpu.memory_space<vmem>>, vector<256x8xf32>
    tpu.vector_store %arg8[%c0_20, %c0_21], %34 {strides = array<i32>} : memref<256x8xf32, #tpu.memory_space<vmem>>, vector<256x8xf32>,
    return
  }
  func.func @transform_0(%arg0: i32) -> (i32, i32) {
    %c0_i32 = arith.constant 0 : i32
    %c0_i32_0 = arith.constant 0 : i32
    return %arg0, %c0_i32 : i32, i32
  }
  func.func @transform_1(%arg0: i32) -> (i32, i32) {
    %c0_i32 = arith.constant 0 : i32
    %c0_i32_0 = arith.constant 0 : i32
    %c0_i32_1 = arith.constant 0 : i32
    return %c0_i32, %c0_i32_0 : i32, i32
  }
  func.func @transform_2(%arg0: i32) -> (i32, i32) {
    %c0_i32 = arith.constant 0 : i32
    %c0_i32_0 = arith.constant 0 : i32
    %c0_i32_1 = arith.constant 0 : i32
    return %c0_i32, %c0_i32_0 : i32, i32
  }
  func.func @transform_3(%arg0: i32) -> (i32, i32) {
    %c0_i32 = arith.constant 0 : i32
    %c0_i32_0 = arith.constant 0 : i32
    %c0_i32_1 = arith.constant 0 : i32
    return %c0_i32, %c0_i32_0 : i32, i32
  }
  func.func @transform_4(%arg0: i32) -> (i32, i32) {
    %c0_i32 = arith.constant 0 : i32
    %c0_i32_0 = arith.constant 0 : i32
    %c0_i32_1 = arith.constant 0 : i32
    return %c0_i32, %c0_i32_0 : i32, i32
  }
  func.func @transform_5(%arg0: i32) -> (i32, i32) {
    %c0_i32 = arith.constant 0 : i32
    %c0_i32_0 = arith.constant 0 : i32
    %c0_i32_1 = arith.constant 0 : i32
    return %c0_i32, %c0_i32_0 : i32, i32
  }
  func.func @transform_6(%arg0: i32) -> (i32, i32) {
    %c0_i32 = arith.constant 0 : i32
    %c0_i32_0 = arith.constant 0 : i32
    %c0_i32_1 = arith.constant 0 : i32
    return %c0_i32, %c0_i32_0 : i32, i32
  }
  func.func @transform_7(%arg0: i32) -> (i32, i32) {
    %c0_i32 = arith.constant 0 : i32
    %c0_i32_0 = arith.constant 0 : i32
    return %arg0, %c0_i32 : i32, i32
  }
}

</mosaic_0001>

<llo_original>
// kernel: tpu_custom_call.1
$region0: #{tpu_custom_call.1}
  #allocation0 [shape = 'u32[]', space=smem, size = 0x4, offset = 0x4, fixed_abs, tag = 'smem constant byte address 0x4 - core index']
  #allocation1 [shape = 'u32[144,128]{1,0:T(1,128)}', space=vmem, size = 0x12000, scoped, tag = 'internal scratch']
  %s0 = inlined_call_operand.vmem [shape: f32[256,192], index: 0, kind: input, shape index: {}]
  %s1 = inlined_call_operand.vmem [shape: bf16[192,128], index: 1, kind: input, shape index: {}]
  %s2 = inlined_call_operand.vmem [shape: f32[1,128], index: 2, kind: input, shape index: {}]
  %s3 = inlined_call_operand.vmem [shape: bf16[128,128], index: 3, kind: input, shape index: {}]
  %s4 = inlined_call_operand.vmem [shape: f32[1,128], index: 4, kind: input, shape index: {}]
  %s5 = inlined_call_operand.vmem [shape: bf16[128,128], index: 5, kind: input, shape index: {}]
  %s6 = inlined_call_operand.vmem [shape: f32[1,128], index: 6, kind: input, shape index: {}]
  %s7 = inlined_call_operand.vmem [shape: f32[256,8], index: 7, kind: output, shape index: {}]
  %s8 = sld [smem:[#allocation0]]
  $region38: #{tpu_custom_call.1} parent=0
    _
  %s10 = ssub.s32 1, %s8
  %s11 = scalar_select 0, %s10, %s8
  // Predicated region
  $region2: #{tpu_custom_call.1} parent=0 // pred_check
    _
  $region3: #{tpu_custom_call.1} parent=0 // pred_check_branch
    %13 = sbr.rel (0) target = $region5
  $region4: #{tpu_custom_call.1} parent=0 // pred_region
    _
  $region5: #{tpu_custom_call.1} parent=0 // pred_fallthru
    _
  // Predicated region
  $region6: #{tpu_custom_call.1} parent=0 // pred_check
    _
  $region7: #{tpu_custom_call.1} parent=0 // pred_check_branch
    %15 = sbr.rel (0) target = $region9
  $region8: #{tpu_custom_call.1} parent=0 // pred_region
    _
  $region9: #{tpu_custom_call.1} parent=0 // pred_fallthru
    _
  // Predicated region
  $region10: #{tpu_custom_call.1} parent=0 // pred_check
    _
  $region11: #{tpu_custom_call.1} parent=0 // pred_check_branch
    %17 = sbr.rel (0) target = $region13
  $region12: #{tpu_custom_call.1} parent=0 // pred_region
    _
  $region13: #{tpu_custom_call.1} parent=0 // pred_fallthru
    _
  // Predicated region
  $region14: #{tpu_custom_call.1} parent=0 // pred_check
    _
  $region15: #{tpu_custom_call.1} parent=0 // pred_check_branch
    %19 = sbr.rel (0) target = $region17
  $region16: #{tpu_custom_call.1} parent=0 // pred_region
    _
  $region17: #{tpu_custom_call.1} parent=0 // pred_fallthru
    _
  // Predicated region
  $region18: #{tpu_custom_call.1} parent=0 // pred_check
    _
  $region19: #{tpu_custom_call.1} parent=0 // pred_check_branch
    %21 = sbr.rel (0) target = $region21
  $region20: #{tpu_custom_call.1} parent=0 // pred_region
    _
  $region21: #{tpu_custom_call.1} parent=0 // pred_fallthru
    _
  // Predicated region
  $region22: #{tpu_custom_call.1} parent=0 // pred_check
    _
  $region23: #{tpu_custom_call.1} parent=0 // pred_check_branch
    %23 = sbr.rel (0) target = $region25
  $region24: #{tpu_custom_call.1} parent=0 // pred_region
    _
  $region25: #{tpu_custom_call.1} parent=0 // pred_fallthru
    _
  // Predicated region
  $region26: #{tpu_custom_call.1} parent=0 // pred_check
    _
  $region27: #{tpu_custom_call.1} parent=0 // pred_check_branch
    %25 = sbr.rel (0) target = $region29
  $region28: #{tpu_custom_call.1} parent=0 // pred_region
    _
  $region29: #{tpu_custom_call.1} parent=0 // pred_fallthru
    _
  %v27 = vld [vmem:[%s0] sm:$0xff]
  %v28 = vld [vmem:[%s0 + $0x8] sm:$0xff]
  %v29 = vld [vmem:[%s0 + $0x10] sm:$0xff]
  %v30 = vld [vmem:[%s0 + $0x18] sm:$0xff]
  %v31 = vld [vmem:[%s0 + $0x20] sm:$0xff]
  %v32 = vld [vmem:[%s0 + $0x28] sm:$0xff]
  %v33 = vld [vmem:[%s0 + $0x30] sm:$0xff]
  %v34 = vld [vmem:[%s0 + $0x38] sm:$0xff]
  %v35 = vld [vmem:[%s0 + $0x40] sm:$0xff]
  %v36 = vld [vmem:[%s0 + $0x48] sm:$0xff]
  %v37 = vld [vmem:[%s0 + $0x50] sm:$0xff]
  %v38 = vld [vmem:[%s0 + $0x58] sm:$0xff]
  %v39 = vld [vmem:[%s0 + $0x60] sm:$0xff]
  %v40 = vld [vmem:[%s0 + $0x68] sm:$0xff]
  %v41 = vld [vmem:[%s0 + $0x70] sm:$0xff]
  %v42 = vld [vmem:[%s0 + $0x78] sm:$0xff]
  %v43 = vld [vmem:[%s0 + $0x80] sm:$0xff]
  %v44 = vld [vmem:[%s0 + $0x88] sm:$0xff]
  %v45 = vld [vmem:[%s0 + $0x90] sm:$0xff]
  %v46 = vld [vmem:[%s0 + $0x98] sm:$0xff]
  %v47 = vld [vmem:[%s0 + $0xa0] sm:$0xff]
  %v48 = vld [vmem:[%s0 + $0xa8] sm:$0xff]
  %v49 = vld [vmem:[%s0 + $0xb0] sm:$0xff]
  %v50 = vld [vmem:[%s0 + $0xb8] sm:$0xff]
  %v51 = vld [vmem:[%s0 + $0xc0] sm:$0xff]
  %v52 = vld [vmem:[%s0 + $0xc8] sm:$0xff]
  %v53 = vld [vmem:[%s0 + $0xd0] sm:$0xff]
  %v54 = vld [vmem:[%s0 + $0xd8] sm:$0xff]
  %v55 = vld [vmem:[%s0 + $0xe0] sm:$0xff]
  %v56 = vld [vmem:[%s0 + $0xe8] sm:$0xff]
  %v57 = vld [vmem:[%s0 + $0xf0] sm:$0xff]
  %v58 = vld [vmem:[%s0 + $0xf8] sm:$0xff]
  %v59 = vld [vmem:[%s0 + $0x100] sm:$0xff]
  %v60 = vld [vmem:[%s0 + $0x108] sm:$0xff]
  %v61 = vld [vmem:[%s0 + $0x110] sm:$0xff]
  %v62 = vld [vmem:[%s0 + $0x118] sm:$0xff]
  %v63 = vld [vmem:[%s0 + $0x120] sm:$0xff]
  %v64 = vld [vmem:[%s0 + $0x128] sm:$0xff]
  %v65 = vld [vmem:[%s0 + $0x130] sm:$0xff]
  %v66 = vld [vmem:[%s0 + $0x138] sm:$0xff]
  %v67 = vld [vmem:[%s0 + $0x140] sm:$0xff]
  %v68 = vld [vmem:[%s0 + $0x148] sm:$0xff]
  %v69 = vld [vmem:[%s0 + $0x150] sm:$0xff]
  %v70 = vld [vmem:[%s0 + $0x158] sm:$0xff]
  %v71 = vld [vmem:[%s0 + $0x160] sm:$0xff]
  %v72 = vld [vmem:[%s0 + $0x168] sm:$0xff]
  %v73 = vld [vmem:[%s0 + $0x170] sm:$0xff]
  %v74 = vld [vmem:[%s0 + $0x178] sm:$0xff]
  %v75 = vld [vmem:[%s0 + $0x180] sm:$0xff]
  %v76 = vld [vmem:[%s0 + $0x188] sm:$0xff]
  %v77 = vld [vmem:[%s0 + $0x190] sm:$0xff]
  %v78 = vld [vmem:[%s0 + $0x198] sm:$0xff]
  %v79 = vld [vmem:[%s0 + $0x1a0] sm:$0xff]
  %v80 = vld [vmem:[%s0 + $0x1a8] sm:$0xff]
  %v81 = vld [vmem:[%s0 + $0x1b0] sm:$0xff]
  %v82 = vld [vmem:[%s0 + $0x1b8] sm:$0xff]
  %v83 = vld [vmem:[%s0 + $0x1c0] sm:$0xff]
  %v84 = vld [vmem:[%s0 + $0x1c8] sm:$0xff]
  %v85 = vld [vmem:[%s0 + $0x1d0] sm:$0xff]
  %v86 = vld [vmem:[%s0 + $0x1d8] sm:$0xff]
  %v87 = vld [vmem:[%s0 + $0x1e0] sm:$0xff]
  %v88 = vld [vmem:[%s0 + $0x1e8] sm:$0xff]
  %v89 = vld [vmem:[%s0 + $0x1f0] sm:$0xff]
  %v90 = vld [vmem:[%s0 + $0x1f8] sm:$0xff]
  %v91 = vpack.c.bf16 %v29, %v27
  %v92 = vpack.c.bf16 %v30, %v28
  %v93 = vpack.c.bf16 %v33, %v31
  %v94 = vpack.c.bf16 %v34, %v32
  %v95 = vpack.c.bf16 %v37, %v35
  %v96 = vpack.c.bf16 %v38, %v36
  %v97 = vpack.c.bf16 %v41, %v39
  %v98 = vpack.c.bf16 %v42, %v40
  %v99 = vpack.c.bf16 %v45, %v43
  %v100 = vpack.c.bf16 %v46, %v44
  %v101 = vpack.c.bf16 %v49, %v47
  %v102 = vpack.c.bf16 %v50, %v48
  %v103 = vpack.c.bf16 %v53, %v51
  %v104 = vpack.c.bf16 %v54, %v52
  %v105 = vpack.c.bf16 %v57, %v55
  %v106 = vpack.c.bf16 %v58, %v56
  %v107 = vpack.c.bf16 %v61, %v59
  %v108 = vpack.c.bf16 %v62, %v60
  %v109 = vpack.c.bf16 %v65, %v63
  %v110 = vpack.c.bf16 %v66, %v64
  %v111 = vpack.c.bf16 %v69, %v67
  %v112 = vpack.c.bf16 %v70, %v68
  %v113 = vpack.c.bf16 %v73, %v71
  %v114 = vpack.c.bf16 %v74, %v72
  %v115 = vpack.c.bf16 %v77, %v75
  %v116 = vpack.c.bf16 %v78, %v76
  %v117 = vpack.c.bf16 %v81, %v79
  %v118 = vpack.c.bf16 %v82, %v80
  %v119 = vpack.c.bf16 %v85, %v83
  %v120 = vpack.c.bf16 %v86, %v84
  %v121 = vpack.c.bf16 %v89, %v87
  %v122 = vpack.c.bf16 %v90, %v88
  %v123 = vld [vmem:[%s1] sm:$0xf]
  %v124 = vld [vmem:[%s1 + $0x4] sm:$0xf]
  %v125 = vld [vmem:[%s1 + $0x8] sm:$0xf]
  %v126 = vld [vmem:[%s1 + $0xc] sm:$0xf]
  %v127 = vld [vmem:[%s1 + $0x10] sm:$0xf]
  %v128 = vld [vmem:[%s1 + $0x14] sm:$0xf]
  %v129 = vld [vmem:[%s1 + $0x18] sm:$0xf]
  %v130 = vld [vmem:[%s1 + $0x1c] sm:$0xf]
  %v131 = vld [vmem:[%s1 + $0x20] sm:$0xf]
  %v132 = vld [vmem:[%s1 + $0x24] sm:$0xf]
  %v133 = vld [vmem:[%s1 + $0x28] sm:$0xf]
  %v134 = vld [vmem:[%s1 + $0x2c] sm:$0xf]
  %v135 = vld [vmem:[%s1 + $0x30] sm:$0xf]
  %v136 = vld [vmem:[%s1 + $0x34] sm:$0xf]
  %v137 = vld [vmem:[%s1 + $0x38] sm:$0xf]
  %v138 = vld [vmem:[%s1 + $0x3c] sm:$0xf]
  %v139 = vld [vmem:[%s1 + $0x40] sm:$0xf]
  %v140 = vld [vmem:[%s1 + $0x44] sm:$0xf]
  %v141 = vld [vmem:[%s1 + $0x48] sm:$0xf]
  %v142 = vld [vmem:[%s1 + $0x4c] sm:$0xf]
  %v143 = vld [vmem:[%s1 + $0x50] sm:$0xf]
  %v144 = vld [vmem:[%s1 + $0x54] sm:$0xf]
  %v145 = vld [vmem:[%s1 + $0x58] sm:$0xf]
  %v146 = vld [vmem:[%s1 + $0x5c] sm:$0xf]
  %v147 = vld [vmem:[%s2] sm:$0x1]
  %v149 = vlaneseq
  %v150 = vshrl.u32 %v149, 7
  %v151 = vsub.s32 0, %v150
  %v152 = vrot.slane %v147, %v151
  %v178 = vunpack.c.l.b16 %v123
  %v179 = vunpack.c.l.b16 %v124
  %v180 = vunpack.c.l.b16 %v125
  %v181 = vunpack.c.l.b16 %v126
  %v182 = vunpack.c.l.b16 %v127
  %v183 = vunpack.c.l.b16 %v128
  %v184 = vunpack.c.l.b16 %v129
  %v185 = vunpack.c.l.b16 %v130
  %v186 = vunpack.c.l.b16 %v131
  %v187 = vunpack.c.l.b16 %v132
  %v188 = vunpack.c.l.b16 %v133
  %v189 = vunpack.c.l.b16 %v134
  %v190 = vunpack.c.l.b16 %v135
  %v191 = vunpack.c.l.b16 %v136
  %v192 = vunpack.c.l.b16 %v137
  %v193 = vunpack.c.l.b16 %v138
  %v194 = vunpack.c.l.b16 %v139
  %v195 = vunpack.c.l.b16 %v140
  %v196 = vunpack.c.l.b16 %v141
  %v197 = vunpack.c.l.b16 %v142
  %v198 = vunpack.c.l.b16 %v143
  %v199 = vunpack.c.l.b16 %v144
  %v200 = vunpack.c.l.b16 %v145
  %v201 = vunpack.c.l.b16 %v146
  %v202 = vpack.c.b16 %v179, %v178
  %v203 = vpack.c.b16 %v181, %v180
  %v204 = vpack.c.b16 %v183, %v182
  %v205 = vpack.c.b16 %v185, %v184
  %v206 = vpack.c.b16 %v187, %v186
  %v207 = vpack.c.b16 %v189, %v188
  %v208 = vpack.c.b16 %v191, %v190
  %v209 = vpack.c.b16 %v193, %v192
  %v210 = vpack.c.b16 %v195, %v194
  %v211 = vpack.c.b16 %v197, %v196
  %v212 = vpack.c.b16 %v199, %v198
  %v213 = vpack.c.b16 %v201, %v200
  %vm226 = vcmask 523264
  %v228 = vsel %vm226, %v92, 0
  %v231 = vsel %vm226, %v94, 0
  %v234 = vsel %vm226, %v96, 0
  %v237 = vsel %vm226, %v98, 0
  %v240 = vsel %vm226, %v100, 0
  %v243 = vsel %vm226, %v102, 0
  %v246 = vsel %vm226, %v104, 0
  %v249 = vsel %vm226, %v106, 0
  %v252 = vsel %vm226, %v108, 0
  %v255 = vsel %vm226, %v110, 0
  %v258 = vsel %vm226, %v112, 0
  %v261 = vsel %vm226, %v114, 0
  %v264 = vsel %vm226, %v116, 0
  %v267 = vsel %vm226, %v118, 0
  %v270 = vsel %vm226, %v120, 0
  %v273 = vsel %vm226, %v122, 0
  %275 = vmatprep.subr.bf16.mxu0 0
  %276 = vmatpush1.bf16.msra.mxu0 %v202
  %277 = vmatprep.subr.bf16.mxu0 0
  %278 = vmatpush1.bf16.msra.mxu0 %v203
  %279 = vmatprep.subr.bf16.mxu0 0
  %280 = vmatpush1.bf16.msra.mxu0 %v204
  %281 = vmatprep.subr.bf16.mxu0 0
  %282 = vmatpush1.bf16.msra.mxu0 %v205
  %283 = vmatprep.subr.bf16.mxu0 0
  %284 = vmatpush1.bf16.msra.mxu0 %v206
  %285 = vmatprep.subr.bf16.mxu0 0
  %286 = vmatpush1.bf16.msra.mxu0 %v207
  %287 = vmatprep.subr.bf16.mxu0 0
  %288 = vmatpush1.bf16.msra.mxu0 %v208
  %289 = vmatprep.subr.bf16.mxu0 0
  %290 = vmatpush1.bf16.msra.mxu0 %v209
  %291 = vmatprep.subr.bf16.mxu0 0
  %292 = vmatpush1.bf16.msra.mxu0 %v210
  %293 = vmatprep.subr.bf16.mxu0 0
  %294 = vmatpush1.bf16.msra.mxu0 %v211
  %295 = vmatprep.subr.bf16.mxu0 0
  %296 = vmatpush1.bf16.msra.mxu0 %v212
  %297 = vmatprep.subr.bf16.mxu0 0
  %298 = vmatpush1.bf16.msra.mxu0 %v213
  %299 = vmatprep.subr.bf16.mxu0 0
  %300 = vmatpush1.bf16.msra.mxu0 0
  %301 = vmatprep.subr.bf16.mxu0 0
  %302 = vmatpush1.bf16.msra.mxu0 0
  %303 = vmatprep.subr.bf16.mxu0 0
  %304 = vmatpush1.bf16.msra.mxu0 0
  %305 = vmatprep.subr.bf16.mxu0 0
  %306 = vmatpush1.bf16.msra.mxu0 0
  %307 = vmatprep.mubr.bf16.mxu0 %v228
  %308 = vmatmul.mubr.bf16.gmra.mrb[0].mxu0 %v91
  %v309 = vpop.f32.mrb[0].mxu0
  %v310 = vadd.f32 %v152, %v309
  %v311 = vpop.f32.mrb[0].mxu0
  %v312 = vpop.f32.mrb[0].mxu0
  %v313 = vadd.f32 %v152, %v312
  %v314 = vpop.f32.mrb[0].mxu0
  %315 = vmatprep.mubr.bf16.mxu0 %v231
  %316 = vmatmul.mubr.bf16.gmra.mrb[0].mxu0 %v93
  %v317 = vpop.f32.mrb[0].mxu0
  %v318 = vadd.f32 %v152, %v317
  %v319 = vpop.f32.mrb[0].mxu0
  %v320 = vpop.f32.mrb[0].mxu0
  %v321 = vadd.f32 %v152, %v320
  %v322 = vpop.f32.mrb[0].mxu0
  %323 = vmatprep.mubr.bf16.mxu0 %v234
  %324 = vmatmul.mubr.bf16.gmra.mrb[0].mxu0 %v95
  %v325 = vpop.f32.mrb[0].mxu0
  %v326 = vadd.f32 %v152, %v325
  %v327 = vpop.f32.mrb[0].mxu0
  %v328 = vpop.f32.mrb[0].mxu0
  %v329 = vadd.f32 %v152, %v328
  %v330 = vpop.f32.mrb[0].mxu0
  %331 = vmatprep.mubr.bf16.mxu0 %v237
  %332 = vmatmul.mubr.bf16.gmra.mrb[0].mxu0 %v97
  %v333 = vpop.f32.mrb[0].mxu0
  %v334 = vadd.f32 %v152, %v333
  %v335 = vpop.f32.mrb[0].mxu0
  %v336 = vpop.f32.mrb[0].mxu0
  %v337 = vadd.f32 %v152, %v336
  %v338 = vpop.f32.mrb[0].mxu0
  %339 = vmatprep.mubr.bf16.mxu0 %v240
  %340 = vmatmul.mubr.bf16.gmra.mrb[0].mxu0 %v99
  %v341 = vpop.f32.mrb[0].mxu0
  %v342 = vadd.f32 %v152, %v341
  %v343 = vpop.f32.mrb[0].mxu0
  %v344 = vpop.f32.mrb[0].mxu0
  %v345 = vadd.f32 %v152, %v344
  %v346 = vpop.f32.mrb[0].mxu0
  %347 = vmatprep.mubr.bf16.mxu0 %v243
  %348 = vmatmul.mubr.bf16.gmra.mrb[0].mxu0 %v101
  %v349 = vpop.f32.mrb[0].mxu0
  %v350 = vadd.f32 %v152, %v349
  %v351 = vpop.f32.mrb[0].mxu0
  %v352 = vpop.f32.mrb[0].mxu0
  %v353 = vadd.f32 %v152, %v352
  %v354 = vpop.f32.mrb[0].mxu0
  %355 = vmatprep.mubr.bf16.mxu0 %v246
  %356 = vmatmul.mubr.bf16.gmra.mrb[0].mxu0 %v103
  %v357 = vpop.f32.mrb[0].mxu0
  %v358 = vadd.f32 %v152, %v357
  %v359 = vpop.f32.mrb[0].mxu0
  %v360 = vpop.f32.mrb[0].mxu0
  %v361 = vadd.f32 %v152, %v360
  %v362 = vpop.f32.mrb[0].mxu0
  %363 = vmatprep.mubr.bf16.mxu0 %v249
  %364 = vmatmul.mubr.bf16.gmra.mrb[0].mxu0 %v105
  %v365 = vpop.f32.mrb[0].mxu0
  %v366 = vadd.f32 %v152, %v365
  %v367 = vpop.f32.mrb[0].mxu0
  %v368 = vpop.f32.mrb[0].mxu0
  %v369 = vadd.f32 %v152, %v368
  %v370 = vpop.f32.mrb[0].mxu0
  %371 = vmatprep.mubr.bf16.mxu0 %v252
  %372 = vmatmul.mubr.bf16.gmra.mrb[0].mxu0 %v107
  %v373 = vpop.f32.mrb[0].mxu0
  %v374 = vadd.f32 %v152, %v373
  %v375 = vpop.f32.mrb[0].mxu0
  %v376 = vpop.f32.mrb[0].mxu0
  %v377 = vadd.f32 %v152, %v376
  %v378 = vpop.f32.mrb[0].mxu0
  %379 = vmatprep.mubr.bf16.mxu0 %v255
  %380 = vmatmul.mubr.bf16.gmra.mrb[0].mxu0 %v109
  %v381 = vpop.f32.mrb[0].mxu0
  %v382 = vadd.f32 %v152, %v381
  %v383 = vpop.f32.mrb[0].mxu0
  %v384 = vpop.f32.mrb[0].mxu0
  %v385 = vadd.f32 %v152, %v384
  %v386 = vpop.f32.mrb[0].mxu0
  %387 = vmatprep.mubr.bf16.mxu0 %v258
  %388 = vmatmul.mubr.bf16.gmra.mrb[0].mxu0 %v111
  %v389 = vpop.f32.mrb[0].mxu0
  %v390 = vadd.f32 %v152, %v389
  %v391 = vpop.f32.mrb[0].mxu0
  %v392 = vpop.f32.mrb[0].mxu0
  %v393 = vadd.f32 %v152, %v392
  %v394 = vpop.f32.mrb[0].mxu0
  %395 = vmatprep.mubr.bf16.mxu0 %v261
  %396 = vmatmul.mubr.bf16.gmra.mrb[0].mxu0 %v113
  %v397 = vpop.f32.mrb[0].mxu0
  %v398 = vadd.f32 %v152, %v397
  %v399 = vpop.f32.mrb[0].mxu0
  %v400 = vpop.f32.mrb[0].mxu0
  %v401 = vadd.f32 %v152, %v400
  %v402 = vpop.f32.mrb[0].mxu0
  %403 = vmatprep.mubr.bf16.mxu0 %v264
  %404 = vmatmul.mubr.bf16.gmra.mrb[0].mxu0 %v115
  %v405 = vpop.f32.mrb[0].mxu0
  %v406 = vadd.f32 %v152, %v405
  %v407 = vpop.f32.mrb[0].mxu0
  %v408 = vpop.f32.mrb[0].mxu0
  %v409 = vadd.f32 %v152, %v408
  %v410 = vpop.f32.mrb[0].mxu0
  %411 = vmatprep.mubr.bf16.mxu0 %v267
  %412 = vmatmul.mubr.bf16.gmra.mrb[0].mxu0 %v117
  %v413 = vpop.f32.mrb[0].mxu0
  %v414 = vadd.f32 %v152, %v413
  %v415 = vpop.f32.mrb[0].mxu0
  %v416 = vpop.f32.mrb[0].mxu0
  %v417 = vadd.f32 %v152, %v416
  %v418 = vpop.f32.mrb[0].mxu0
  %419 = vmatprep.mubr.bf16.mxu0 %v270
  %420 = vmatmul.mubr.bf16.gmra.mrb[0].mxu0 %v119
  %v421 = vpop.f32.mrb[0].mxu0
  %v422 = vadd.f32 %v152, %v421
  %v423 = vpop.f32.mrb[0].mxu0
  %v424 = vpop.f32.mrb[0].mxu0
  %v425 = vadd.f32 %v152, %v424
  %v426 = vpop.f32.mrb[0].mxu0
  %427 = vmatprep.mubr.bf16.mxu0 %v273
  %428 = vmatmul.mubr.bf16.gmra.mrb[0].mxu0 %v121
  %v429 = vpop.f32.mrb[0].mxu0
  %v430 = vadd.f32 %v152, %v429
  %v431 = vpop.f32.mrb[0].mxu0
  %v432 = vpop.f32.mrb[0].mxu0
  %v433 = vadd.f32 %v152, %v432
  %v434 = vpop.f32.mrb[0].mxu0
  %435 = vdwg.mxu0
  %vm436 = vcmp.gt.f32.partialorder %v310, 0.0
  %vm437 = vcmp.gt.f32.partialorder %v313, 0.0
  %vm438 = vcmp.gt.f32.partialorder %v318, 0.0
  %vm439 = vcmp.gt.f32.partialorder %v321, 0.0
  %vm440 = vcmp.gt.f32.partialorder %v326, 0.0
  %vm441 = vcmp.gt.f32.partialorder %v329, 0.0
  %vm442 = vcmp.gt.f32.partialorder %v334, 0.0
  %vm443 = vcmp.gt.f32.partialorder %v337, 0.0
  %vm444 = vcmp.gt.f32.partialorder %v342, 0.0
  %vm445 = vcmp.gt.f32.partialorder %v345, 0.0
  %vm446 = vcmp.gt.f32.partialorder %v350, 0.0
  %vm447 = vcmp.gt.f32.partialorder %v353, 0.0
  %vm448 = vcmp.gt.f32.partialorder %v358, 0.0
  %vm449 = vcmp.gt.f32.partialorder %v361, 0.0
  %vm450 = vcmp.gt.f32.partialorder %v366, 0.0
  %vm451 = vcmp.gt.f32.partialorder %v369, 0.0
  %vm452 = vcmp.gt.f32.partialorder %v374, 0.0
  %vm453 = vcmp.gt.f32.partialorder %v377, 0.0
  %vm454 = vcmp.gt.f32.partialorder %v382, 0.0
  %vm455 = vcmp.gt.f32.partialorder %v385, 0.0
  %vm456 = vcmp.gt.f32.partialorder %v390, 0.0
  %vm457 = vcmp.gt.f32.partialorder %v393, 0.0
  %vm458 = vcmp.gt.f32.partialorder %v398, 0.0
  %vm459 = vcmp.gt.f32.partialorder %v401, 0.0
  %vm460 = vcmp.gt.f32.partialorder %v406, 0.0
  %vm461 = vcmp.gt.f32.partialorder %v409, 0.0
  %vm462 = vcmp.gt.f32.partialorder %v414, 0.0
  %vm463 = vcmp.gt.f32.partialorder %v417, 0.0
  %vm464 = vcmp.gt.f32.partialorder %v422, 0.0
  %vm465 = vcmp.gt.f32.partialorder %v425, 0.0
  %vm466 = vcmp.gt.f32.partialorder %v430, 0.0
  %vm467 = vcmp.gt.f32.partialorder %v433, 0.0
  %v468 = vmul.f32 %v310, 0.01
  %v469 = vmul.f32 %v313, 0.01
  %v470 = vmul.f32 %v318, 0.01
  %v471 = vmul.f32 %v321, 0.01
  %v472 = vmul.f32 %v326, 0.01
  %v473 = vmul.f32 %v329, 0.01
  %v474 = vmul.f32 %v334, 0.01
  %v475 = vmul.f32 %v337, 0.01
  %v476 = vmul.f32 %v342, 0.01
  %v477 = vmul.f32 %v345, 0.01
  %v478 = vmul.f32 %v350, 0.01
  %v479 = vmul.f32 %v353, 0.01
  %v480 = vmul.f32 %v358, 0.01
  %v481 = vmul.f32 %v361, 0.01
  %v482 = vmul.f32 %v366, 0.01
  %v483 = vmul.f32 %v369, 0.01
  %v484 = vmul.f32 %v374, 0.01
  %v485 = vmul.f32 %v377, 0.01
  %v486 = vmul.f32 %v382, 0.01
  %v487 = vmul.f32 %v385, 0.01
  %v488 = vmul.f32 %v390, 0.01
  %v489 = vmul.f32 %v393, 0.01
  %v490 = vmul.f32 %v398, 0.01
  %v491 = vmul.f32 %v401, 0.01
  %v492 = vmul.f32 %v406, 0.01
  %v493 = vmul.f32 %v409, 0.01
  %v494 = vmul.f32 %v414, 0.01
  %v495 = vmul.f32 %v417, 0.01
  %v496 = vmul.f32 %v422, 0.01
  %v497 = vmul.f32 %v425, 0.01
  %v498 = vmul.f32 %v430, 0.01
  %v499 = vmul.f32 %v433, 0.01
  %v500 = vsel %vm436, %v310, %v468
  %v501 = vsel %vm437, %v313, %v469
  %v502 = vsel %vm438, %v318, %v470
  %v503 = vsel %vm439, %v321, %v471
  %v504 = vsel %vm440, %v326, %v472
  %v505 = vsel %vm441, %v329, %v473
  %v506 = vsel %vm442, %v334, %v474
  %v507 = vsel %vm443, %v337, %v475
  %v508 = vsel %vm444, %v342, %v476
  %v509 = vsel %vm445, %v345, %v477
  %v510 = vsel %vm446, %v350, %v478
  %v511 = vsel %vm447, %v353, %v479
  %v512 = vsel %vm448, %v358, %v480
  %v513 = vsel %vm449, %v361, %v481
  %v514 = vsel %vm450, %v366, %v482
  %v515 = vsel %vm451, %v369, %v483
  %v516 = vsel %vm452, %v374, %v484
  %v517 = vsel %vm453, %v377, %v485
  %v518 = vsel %vm454, %v382, %v486
  %v519 = vsel %vm455, %v385, %v487
  %v520 = vsel %vm456, %v390, %v488
  %v521 = vsel %vm457, %v393, %v489
  %v522 = vsel %vm458, %v398, %v490
  %v523 = vsel %vm459, %v401, %v491
  %v524 = vsel %vm460, %v406, %v492
  %v525 = vsel %vm461, %v409, %v493
  %v526 = vsel %vm462, %v414, %v494
  %v527 = vsel %vm463, %v417, %v495
  %v528 = vsel %vm464, %v422, %v496
  %v529 = vsel %vm465, %v425, %v497
  %v530 = vsel %vm466, %v430, %v498
  %v531 = vsel %vm467, %v433, %v499
  %v532 = vpack.c.bf16 %v501, %v500
  %v533 = vpack.c.bf16 %v503, %v502
  %v534 = vpack.c.bf16 %v505, %v504
  %v535 = vpack.c.bf16 %v507, %v506
  %v536 = vpack.c.bf16 %v509, %v508
  %v537 = vpack.c.bf16 %v511, %v510
  %v538 = vpack.c.bf16 %v513, %v512
  %v539 = vpack.c.bf16 %v515, %v514
  %v540 = vpack.c.bf16 %v517, %v516
  %v541 = vpack.c.bf16 %v519, %v518
  %v542 = vpack.c.bf16 %v521, %v520
  %v543 = vpack.c.bf16 %v523, %v522
  %v544 = vpack.c.bf16 %v525, %v524
  %v545 = vpack.c.bf16 %v527, %v526
  %v546 = vpack.c.bf16 %v529, %v528
  %v547 = vpack.c.bf16 %v531, %v530
  %v548 = vld [vmem:[%s3] sm:$0xf]
  %v549 = vld [vmem:[%s3 + $0x4] sm:$0xf]
  %v550 = vld [vmem:[%s3 + $0x8] sm:$0xf]
  %v551 = vld [vmem:[%s3 + $0xc] sm:$0xf]
  %v552 = vld [vmem:[%s3 + $0x10] sm:$0xf]
  %v553 = vld [vmem:[%s3 + $0x14] sm:$0xf]
  %v554 = vld [vmem:[%s3 + $0x18] sm:$0xf]
  %v555 = vld [vmem:[%s3 + $0x1c] sm:$0xf]
  %v556 = vld [vmem:[%s3 + $0x20] sm:$0xf]
  %v557 = vld [vmem:[%s3 + $0x24] sm:$0xf]
  %v558 = vld [vmem:[%s3 + $0x28] sm:$0xf]
  %v559 = vld [vmem:[%s3 + $0x2c] sm:$0xf]
  %v560 = vld [vmem:[%s3 + $0x30] sm:$0xf]
  %v561 = vld [vmem:[%s3 + $0x34] sm:$0xf]
  %v562 = vld [vmem:[%s3 + $0x38] sm:$0xf]
  %v563 = vld [vmem:[%s3 + $0x3c] sm:$0xf]
  %v564 = vld [vmem:[%s4] sm:$0x1]
  %v566 = vlaneseq
  %v567 = vshrl.u32 %v566, 7
  %v568 = vsub.s32 0, %v567
  %v569 = vrot.slane %v564, %v568
  %v587 = vunpack.c.l.b16 %v548
  %v588 = vunpack.c.l.b16 %v549
  %v589 = vunpack.c.l.b16 %v550
  %v590 = vunpack.c.l.b16 %v551
  %v591 = vunpack.c.l.b16 %v552
  %v592 = vunpack.c.l.b16 %v553
  %v593 = vunpack.c.l.b16 %v554
  %v594 = vunpack.c.l.b16 %v555
  %v595 = vunpack.c.l.b16 %v556
  %v596 = vunpack.c.l.b16 %v557
  %v597 = vunpack.c.l.b16 %v558
  %v598 = vunpack.c.l.b16 %v559
  %v599 = vunpack.c.l.b16 %v560
  %v600 = vunpack.c.l.b16 %v561
  %v601 = vunpack.c.l.b16 %v562
  %v602 = vunpack.c.l.b16 %v563
  %v603 = vpack.c.b16 %v588, %v587
  %v604 = vpack.c.b16 %v590, %v589
  %v605 = vpack.c.b16 %v592, %v591
  %v606 = vpack.c.b16 %v594, %v593
  %v607 = vpack.c.b16 %v596, %v595
  %v608 = vpack.c.b16 %v598, %v597
  %v609 = vpack.c.b16 %v600, %v599
  %v610 = vpack.c.b16 %v602, %v601
  %619 = vmatprep.subr.bf16.mxu0 0
  %620 = vmatpush1.bf16.msra.mxu0 %v603
  %621 = vmatprep.subr.bf16.mxu0 0
  %622 = vmatpush1.bf16.msra.mxu0 %v604
  %623 = vmatprep.subr.bf16.mxu0 0
  %624 = vmatpush1.bf16.msra.mxu0 %v605
  %625 = vmatprep.subr.bf16.mxu0 0
  %626 = vmatpush1.bf16.msra.mxu0 %v606
  %627 = vmatprep.subr.bf16.mxu0 0
  %628 = vmatpush1.bf16.msra.mxu0 %v607
  %629 = vmatprep.subr.bf16.mxu0 0
  %630 = vmatpush1.bf16.msra.mxu0 %v608
  %631 = vmatprep.subr.bf16.mxu0 0
  %632 = vmatpush1.bf16.msra.mxu0 %v609
  %633 = vmatprep.subr.bf16.mxu0 0
  %634 = vmatpush1.bf16.msra.mxu0 %v610
  %635 = vmatprep.subr.bf16.mxu0 0
  %636 = vmatpush1.bf16.msra.mxu0 0
  %637 = vmatprep.subr.bf16.mxu0 0
  %638 = vmatpush1.bf16.msra.mxu0 0
  %639 = vmatprep.subr.bf16.mxu0 0
  %640 = vmatpush1.bf16.msra.mxu0 0
  %641 = vmatprep.subr.bf16.mxu0 0
  %642 = vmatpush1.bf16.msra.mxu0 0
  %643 = vmatprep.subr.bf16.mxu0 0
  %644 = vmatpush1.bf16.msra.mxu0 0
  %645 = vmatprep.subr.bf16.mxu0 0
  %646 = vmatpush1.bf16.msra.mxu0 0
  %647 = vmatprep.subr.bf16.mxu0 0
  %648 = vmatpush1.bf16.msra.mxu0 0
  %649 = vmatprep.subr.bf16.mxu0 0
  %650 = vmatpush1.bf16.msra.mxu0 0
  %651 = vmatprep.mubr.bf16.mxu0 0
  %652 = vmatmul.mubr.bf16.gmra.mrb[0].mxu0 %v532
  %v653 = vpop.f32.mrb[0].mxu0
  %v654 = vadd.f32 %v569, %v653
  %v655 = vpop.f32.mrb[0].mxu0
  %v656 = vpop.f32.mrb[0].mxu0
  %v657 = vadd.f32 %v569, %v656
  %v658 = vpop.f32.mrb[0].mxu0
  %659 = vmatprep.mubr.bf16.mxu0 0
  %660 = vmatmul.mubr.bf16.gmra.mrb[0].mxu0 %v533
  %v661 = vpop.f32.mrb[0].mxu0
  %v662 = vadd.f32 %v569, %v661
  %v663 = vpop.f32.mrb[0].mxu0
  %v664 = vpop.f32.mrb[0].mxu0
  %v665 = vadd.f32 %v569, %v664
  %v666 = vpop.f32.mrb[0].mxu0
  %667 = vmatprep.mubr.bf16.mxu0 0
  %668 = vmatmul.mubr.bf16.gmra.mrb[0].mxu0 %v534
  %v669 = vpop.f32.mrb[0].mxu0
  %v670 = vadd.f32 %v569, %v669
  %v671 = vpop.f32.mrb[0].mxu0
  %v672 = vpop.f32.mrb[0].mxu0
  %v673 = vadd.f32 %v569, %v672
  %v674 = vpop.f32.mrb[0].mxu0
  %675 = vmatprep.mubr.bf16.mxu0 0
  %676 = vmatmul.mubr.bf16.gmra.mrb[0].mxu0 %v535
  %v677 = vpop.f32.mrb[0].mxu0
  %v678 = vadd.f32 %v569, %v677
  %v679 = vpop.f32.mrb[0].mxu0
  %v680 = vpop.f32.mrb[0].mxu0
  %v681 = vadd.f32 %v569, %v680
  %v682 = vpop.f32.mrb[0].mxu0
  %683 = vmatprep.mubr.bf16.mxu0 0
  %684 = vmatmul.mubr.bf16.gmra.mrb[0].mxu0 %v536
  %v685 = vpop.f32.mrb[0].mxu0
  %v686 = vadd.f32 %v569, %v685
  %v687 = vpop.f32.mrb[0].mxu0
  %v688 = vpop.f32.mrb[0].mxu0
  %v689 = vadd.f32 %v569, %v688
  %v690 = vpop.f32.mrb[0].mxu0
  %691 = vmatprep.mubr.bf16.mxu0 0
  %692 = vmatmul.mubr.bf16.gmra.mrb[0].mxu0 %v537
  %v693 = vpop.f32.mrb[0].mxu0
  %v694 = vadd.f32 %v569, %v693
  %v695 = vpop.f32.mrb[0].mxu0
  %v696 = vpop.f32.mrb[0].mxu0
  %v697 = vadd.f32 %v569, %v696
  %v698 = vpop.f32.mrb[0].mxu0
  %699 = vmatprep.mubr.bf16.mxu0 0
  %700 = vmatmul.mubr.bf16.gmra.mrb[0].mxu0 %v538
  %v701 = vpop.f32.mrb[0].mxu0
  %v702 = vadd.f32 %v569, %v701
  %v703 = vpop.f32.mrb[0].mxu0
  %v704 = vpop.f32.mrb[0].mxu0
  %v705 = vadd.f32 %v569, %v704
  %v706 = vpop.f32.mrb[0].mxu0
  %707 = vmatprep.mubr.bf16.mxu0 0
  %708 = vmatmul.mubr.bf16.gmra.mrb[0].mxu0 %v539
  %v709 = vpop.f32.mrb[0].mxu0
  %v710 = vadd.f32 %v569, %v709
  %v711 = vpop.f32.mrb[0].mxu0
  %v712 = vpop.f32.mrb[0].mxu0
  %v713 = vadd.f32 %v569, %v712
  %v714 = vpop.f32.mrb[0].mxu0
  %715 = vmatprep.mubr.bf16.mxu0 0
  %716 = vmatmul.mubr.bf16.gmra.mrb[0].mxu0 %v540
  %v717 = vpop.f32.mrb[0].mxu0
  %v718 = vadd.f32 %v569, %v717
  %v719 = vpop.f32.mrb[0].mxu0
  %v720 = vpop.f32.mrb[0].mxu0
  %v721 = vadd.f32 %v569, %v720
  %v722 = vpop.f32.mrb[0].mxu0
  %723 = vmatprep.mubr.bf16.mxu0 0
  %724 = vmatmul.mubr.bf16.gmra.mrb[0].mxu0 %v541
  %v725 = vpop.f32.mrb[0].mxu0
  %v726 = vadd.f32 %v569, %v725
  %v727 = vpop.f32.mrb[0].mxu0
  %v728 = vpop.f32.mrb[0].mxu0
  %v729 = vadd.f32 %v569, %v728
  %v730 = vpop.f32.mrb[0].mxu0
  %731 = vmatprep.mubr.bf16.mxu0 0
  %732 = vmatmul.mubr.bf16.gmra.mrb[0].mxu0 %v542
  %v733 = vpop.f32.mrb[0].mxu0
  %v734 = vadd.f32 %v569, %v733
  %v735 = vpop.f32.mrb[0].mxu0
  %v736 = vpop.f32.mrb[0].mxu0
  %v737 = vadd.f32 %v569, %v736
  %v738 = vpop.f32.mrb[0].mxu0
  %739 = vmatprep.mubr.bf16.mxu0 0
  %740 = vmatmul.mubr.bf16.gmra.mrb[0].mxu0 %v543
  %v741 = vpop.f32.mrb[0].mxu0
  %v742 = vadd.f32 %v569, %v741
  %v743 = vpop.f32.mrb[0].mxu0
  %v744 = vpop.f32.mrb[0].mxu0
  %v745 = vadd.f32 %v569, %v744
  %v746 = vpop.f32.mrb[0].mxu0
  %747 = vmatprep.mubr.bf16.mxu0 0
  %748 = vmatmul.mubr.bf16.gmra.mrb[0].mxu0 %v544
  %v749 = vpop.f32.mrb[0].mxu0
  %v750 = vadd.f32 %v569, %v749
  %v751 = vpop.f32.mrb[0].mxu0
  %v752 = vpop.f32.mrb[0].mxu0
  %v753 = vadd.f32 %v569, %v752
  %v754 = vpop.f32.mrb[0].mxu0
  %755 = vmatprep.mubr.bf16.mxu0 0
  %756 = vmatmul.mubr.bf16.gmra.mrb[0].mxu0 %v545
  %v757 = vpop.f32.mrb[0].mxu0
  %v758 = vadd.f32 %v569, %v757
  %v759 = vpop.f32.mrb[0].mxu0
  %v760 = vpop.f32.mrb[0].mxu0
  %v761 = vadd.f32 %v569, %v760
  %v762 = vpop.f32.mrb[0].mxu0
  %763 = vmatprep.mubr.bf16.mxu0 0
  %764 = vmatmul.mubr.bf16.gmra.mrb[0].mxu0 %v546
  %v765 = vpop.f32.mrb[0].mxu0
  %v766 = vadd.f32 %v569, %v765
  %v767 = vpop.f32.mrb[0].mxu0
  %v768 = vpop.f32.mrb[0].mxu0
  %v769 = vadd.f32 %v569, %v768
  %v770 = vpop.f32.mrb[0].mxu0
  %771 = vmatprep.mubr.bf16.mxu0 0
  %772 = vmatmul.mubr.bf16.gmra.mrb[0].mxu0 %v547
  %v773 = vpop.f32.mrb[0].mxu0
  %v774 = vadd.f32 %v569, %v773
  %v775 = vpop.f32.mrb[0].mxu0
  %v776 = vpop.f32.mrb[0].mxu0
  %v777 = vadd.f32 %v569, %v776
  %v778 = vpop.f32.mrb[0].mxu0
  %779 = vdwg.mxu0
  %vm780 = vcmp.gt.f32.partialorder %v654, 0.0
  %vm781 = vcmp.gt.f32.partialorder %v657, 0.0
  %vm782 = vcmp.gt.f32.partialorder %v662, 0.0
  %vm783 = vcmp.gt.f32.partialorder %v665, 0.0
  %vm784 = vcmp.gt.f32.partialorder %v670, 0.0
  %vm785 = vcmp.gt.f32.partialorder %v673, 0.0
  %vm786 = vcmp.gt.f32.partialorder %v678, 0.0
  %vm787 = vcmp.gt.f32.partialorder %v681, 0.0
  %vm788 = vcmp.gt.f32.partialorder %v686, 0.0
  %vm789 = vcmp.gt.f32.partialorder %v689, 0.0
  %vm790 = vcmp.gt.f32.partialorder %v694, 0.0
  %vm791 = vcmp.gt.f32.partialorder %v697, 0.0
  %vm792 = vcmp.gt.f32.partialorder %v702, 0.0
  %vm793 = vcmp.gt.f32.partialorder %v705, 0.0
  %vm794 = vcmp.gt.f32.partialorder %v710, 0.0
  %vm795 = vcmp.gt.f32.partialorder %v713, 0.0
  %vm796 = vcmp.gt.f32.partialorder %v718, 0.0
  %vm797 = vcmp.gt.f32.partialorder %v721, 0.0
  %vm798 = vcmp.gt.f32.partialorder %v726, 0.0
  %vm799 = vcmp.gt.f32.partialorder %v729, 0.0
  %vm800 = vcmp.gt.f32.partialorder %v734, 0.0
  %vm801 = vcmp.gt.f32.partialorder %v737, 0.0
  %vm802 = vcmp.gt.f32.partialorder %v742, 0.0
  %vm803 = vcmp.gt.f32.partialorder %v745, 0.0
  %vm804 = vcmp.gt.f32.partialorder %v750, 0.0
  %vm805 = vcmp.gt.f32.partialorder %v753, 0.0
  %vm806 = vcmp.gt.f32.partialorder %v758, 0.0
  %vm807 = vcmp.gt.f32.partialorder %v761, 0.0
  %vm808 = vcmp.gt.f32.partialorder %v766, 0.0
  %vm809 = vcmp.gt.f32.partialorder %v769, 0.0
  %vm810 = vcmp.gt.f32.partialorder %v774, 0.0
  %vm811 = vcmp.gt.f32.partialorder %v777, 0.0
  %v812 = vmul.f32 %v654, 0.01
  %v813 = vmul.f32 %v657, 0.01
  %v814 = vmul.f32 %v662, 0.01
  %v815 = vmul.f32 %v665, 0.01
  %v816 = vmul.f32 %v670, 0.01
  %v817 = vmul.f32 %v673, 0.01
  %v818 = vmul.f32 %v678, 0.01
  %v819 = vmul.f32 %v681, 0.01
  %v820 = vmul.f32 %v686, 0.01
  %v821 = vmul.f32 %v689, 0.01
  %v822 = vmul.f32 %v694, 0.01
  %v823 = vmul.f32 %v697, 0.01
  %v824 = vmul.f32 %v702, 0.01
  %v825 = vmul.f32 %v705, 0.01
  %v826 = vmul.f32 %v710, 0.01
  %v827 = vmul.f32 %v713, 0.01
  %v828 = vmul.f32 %v718, 0.01
  %v829 = vmul.f32 %v721, 0.01
  %v830 = vmul.f32 %v726, 0.01
  %v831 = vmul.f32 %v729, 0.01
  %v832 = vmul.f32 %v734, 0.01
  %v833 = vmul.f32 %v737, 0.01
  %v834 = vmul.f32 %v742, 0.01
  %v835 = vmul.f32 %v745, 0.01
  %v836 = vmul.f32 %v750, 0.01
  %v837 = vmul.f32 %v753, 0.01
  %v838 = vmul.f32 %v758, 0.01
  %v839 = vmul.f32 %v761, 0.01
  %v840 = vmul.f32 %v766, 0.01
  %v841 = vmul.f32 %v769, 0.01
  %v842 = vmul.f32 %v774, 0.01
  %v843 = vmul.f32 %v777, 0.01
  %v844 = vsel %vm780, %v654, %v812
  %v845 = vsel %vm781, %v657, %v813
  %v846 = vsel %vm782, %v662, %v814
  %v847 = vsel %vm783, %v665, %v815
  %v848 = vsel %vm784, %v670, %v816
  %v849 = vsel %vm785, %v673, %v817
  %v850 = vsel %vm786, %v678, %v818
  %v851 = vsel %vm787, %v681, %v819
  %v852 = vsel %vm788, %v686, %v820
  %v853 = vsel %vm789, %v689, %v821
  %v854 = vsel %vm790, %v694, %v822
  %v855 = vsel %vm791, %v697, %v823
  %v856 = vsel %vm792, %v702, %v824
  %v857 = vsel %vm793, %v705, %v825
  %v858 = vsel %vm794, %v710, %v826
  %v859 = vsel %vm795, %v713, %v827
  %v860 = vsel %vm796, %v718, %v828
  %v861 = vsel %vm797, %v721, %v829
  %v862 = vsel %vm798, %v726, %v830
  %v863 = vsel %vm799, %v729, %v831
  %v864 = vsel %vm800, %v734, %v832
  %v865 = vsel %vm801, %v737, %v833
  %v866 = vsel %vm802, %v742, %v834
  %v867 = vsel %vm803, %v745, %v835
  %v868 = vsel %vm804, %v750, %v836
  %v869 = vsel %vm805, %v753, %v837
  %v870 = vsel %vm806, %v758, %v838
  %v871 = vsel %vm807, %v761, %v839
  %v872 = vsel %vm808, %v766, %v840
  %v873 = vsel %vm809, %v769, %v841
  %v874 = vsel %vm810, %v774, %v842
  %v875 = vsel %vm811, %v777, %v843
  %v876 = vpack.c.bf16 %v845, %v844
  %v877 = vpack.c.bf16 %v847, %v846
  %v878 = vpack.c.bf16 %v849, %v848
  %v879 = vpack.c.bf16 %v851, %v850
  %v880 = vpack.c.bf16 %v853, %v852
  %v881 = vpack.c.bf16 %v855, %v854
  %v882 = vpack.c.bf16 %v857, %v856
  %v883 = vpack.c.bf16 %v859, %v858
  %v884 = vpack.c.bf16 %v861, %v860
  %v885 = vpack.c.bf16 %v863, %v862
  %v886 = vpack.c.bf16 %v865, %v864
  %v887 = vpack.c.bf16 %v867, %v866
  %v888 = vpack.c.bf16 %v869, %v868
  %v889 = vpack.c.bf16 %v871, %v870
  %v890 = vpack.c.bf16 %v873, %v872
  %v891 = vpack.c.bf16 %v875, %v874
  %v892 = vld [vmem:[%s5] sm:$0xf]
  %v893 = vld [vmem:[%s5 + $0x4] sm:$0xf]
  %v894 = vld [vmem:[%s5 + $0x8] sm:$0xf]
  %v895 = vld [vmem:[%s5 + $0xc] sm:$0xf]
  %v896 = vld [vmem:[%s5 + $0x10] sm:$0xf]
  %v897 = vld [vmem:[%s5 + $0x14] sm:$0xf]
  %v898 = vld [vmem:[%s5 + $0x18] sm:$0xf]
  %v899 = vld [vmem:[%s5 + $0x1c] sm:$0xf]
  %v900 = vld [vmem:[%s5 + $0x20] sm:$0xf]
  %v901 = vld [vmem:[%s5 + $0x24] sm:$0xf]
  %v902 = vld [vmem:[%s5 + $0x28] sm:$0xf]
  %v903 = vld [vmem:[%s5 + $0x2c] sm:$0xf]
  %v904 = vld [vmem:[%s5 + $0x30] sm:$0xf]
  %v905 = vld [vmem:[%s5 + $0x34] sm:$0xf]
  %v906 = vld [vmem:[%s5 + $0x38] sm:$0xf]
  %v907 = vld [vmem:[%s5 + $0x3c] sm:$0xf]
  %v908 = vld [vmem:[%s6] sm:$0x1]
  %v910 = vlaneseq
  %v911 = vshrl.u32 %v910, 7
  %v912 = vsub.s32 0, %v911
  %v913 = vrot.slane %v908, %v912
  %v931 = vunpack.c.l.b16 %v892
  %v932 = vunpack.c.l.b16 %v893
  %v933 = vunpack.c.l.b16 %v894
  %v934 = vunpack.c.l.b16 %v895
  %v935 = vunpack.c.l.b16 %v896
  %v936 = vunpack.c.l.b16 %v897
  %v937 = vunpack.c.l.b16 %v898
  %v938 = vunpack.c.l.b16 %v899
  %v939 = vunpack.c.l.b16 %v900
  %v940 = vunpack.c.l.b16 %v901
  %v941 = vunpack.c.l.b16 %v902
  %v942 = vunpack.c.l.b16 %v903
  %v943 = vunpack.c.l.b16 %v904
  %v944 = vunpack.c.l.b16 %v905
  %v945 = vunpack.c.l.b16 %v906
  %v946 = vunpack.c.l.b16 %v907
  %v947 = vpack.c.b16 %v932, %v931
  %v948 = vpack.c.b16 %v934, %v933
  %v949 = vpack.c.b16 %v936, %v935
  %v950 = vpack.c.b16 %v938, %v937
  %v951 = vpack.c.b16 %v940, %v939
  %v952 = vpack.c.b16 %v942, %v941
  %v953 = vpack.c.b16 %v944, %v943
  %v954 = vpack.c.b16 %v946, %v945
  %963 = vmatprep.subr.bf16.mxu0 0
  %964 = vmatpush1.bf16.msra.mxu0 %v947
  %965 = vmatprep.subr.bf16.mxu0 0
  %966 = vmatpush1.bf16.msra.mxu0 %v948
  %967 = vmatprep.subr.bf16.mxu0 0
  %968 = vmatpush1.bf16.msra.mxu0 %v949
  %969 = vmatprep.subr.bf16.mxu0 0
  %970 = vmatpush1.bf16.msra.mxu0 %v950
  %971 = vmatprep.subr.bf16.mxu0 0
  %972 = vmatpush1.bf16.msra.mxu0 %v951
  %973 = vmatprep.subr.bf16.mxu0 0
  %974 = vmatpush1.bf16.msra.mxu0 %v952
  %975 = vmatprep.subr.bf16.mxu0 0
  %976 = vmatpush1.bf16.msra.mxu0 %v953
  %977 = vmatprep.subr.bf16.mxu0 0
  %978 = vmatpush1.bf16.msra.mxu0 %v954
  %979 = vmatprep.subr.bf16.mxu0 0
  %980 = vmatpush1.bf16.msra.mxu0 0
  %981 = vmatprep.subr.bf16.mxu0 0
  %982 = vmatpush1.bf16.msra.mxu0 0
  %983 = vmatprep.subr.bf16.mxu0 0
  %984 = vmatpush1.bf16.msra.mxu0 0
  %985 = vmatprep.subr.bf16.mxu0 0
  %986 = vmatpush1.bf16.msra.mxu0 0
  %987 = vmatprep.subr.bf16.mxu0 0
  %988 = vmatpush1.bf16.msra.mxu0 0
  %989 = vmatprep.subr.bf16.mxu0 0
  %990 = vmatpush1.bf16.msra.mxu0 0
  %991 = vmatprep.subr.bf16.mxu0 0
  %992 = vmatpush1.bf16.msra.mxu0 0
  %993 = vmatprep.subr.bf16.mxu0 0
  %994 = vmatpush1.bf16.msra.mxu0 0
  %995 = vmatprep.mubr.bf16.mxu0 0
  %996 = vmatmul.mubr.bf16.gmra.mrb[0].mxu0 %v876
  %v997 = vpop.f32.mrb[0].mxu0
  %v998 = vadd.f32 %v913, %v997
  %v999 = vpop.f32.mrb[0].mxu0
  %v1000 = vpop.f32.mrb[0].mxu0
  %v1001 = vadd.f32 %v913, %v1000
  %v1002 = vpop.f32.mrb[0].mxu0
  %1003 = vmatprep.mubr.bf16.mxu0 0
  %1004 = vmatmul.mubr.bf16.gmra.mrb[0].mxu0 %v877
  %v1005 = vpop.f32.mrb[0].mxu0
  %v1006 = vadd.f32 %v913, %v1005
  %v1007 = vpop.f32.mrb[0].mxu0
  %v1008 = vpop.f32.mrb[0].mxu0
  %v1009 = vadd.f32 %v913, %v1008
  %v1010 = vpop.f32.mrb[0].mxu0
  %1011 = vmatprep.mubr.bf16.mxu0 0
  %1012 = vmatmul.mubr.bf16.gmra.mrb[0].mxu0 %v878
  %v1013 = vpop.f32.mrb[0].mxu0
  %v1014 = vadd.f32 %v913, %v1013
  %v1015 = vpop.f32.mrb[0].mxu0
  %v1016 = vpop.f32.mrb[0].mxu0
  %v1017 = vadd.f32 %v913, %v1016
  %v1018 = vpop.f32.mrb[0].mxu0
  %1019 = vmatprep.mubr.bf16.mxu0 0
  %1020 = vmatmul.mubr.bf16.gmra.mrb[0].mxu0 %v879
  %v1021 = vpop.f32.mrb[0].mxu0
  %v1022 = vadd.f32 %v913, %v1021
  %v1023 = vpop.f32.mrb[0].mxu0
  %v1024 = vpop.f32.mrb[0].mxu0
  %v1025 = vadd.f32 %v913, %v1024
  %v1026 = vpop.f32.mrb[0].mxu0
  %1027 = vmatprep.mubr.bf16.mxu0 0
  %1028 = vmatmul.mubr.bf16.gmra.mrb[0].mxu0 %v880
  %v1029 = vpop.f32.mrb[0].mxu0
  %v1030 = vadd.f32 %v913, %v1029
  %v1031 = vpop.f32.mrb[0].mxu0
  %v1032 = vpop.f32.mrb[0].mxu0
  %v1033 = vadd.f32 %v913, %v1032
  %v1034 = vpop.f32.mrb[0].mxu0
  %1035 = vmatprep.mubr.bf16.mxu0 0
  %1036 = vmatmul.mubr.bf16.gmra.mrb[0].mxu0 %v881
  %v1037 = vpop.f32.mrb[0].mxu0
  %v1038 = vadd.f32 %v913, %v1037
  %v1039 = vpop.f32.mrb[0].mxu0
  %v1040 = vpop.f32.mrb[0].mxu0
  %v1041 = vadd.f32 %v913, %v1040
  %v1042 = vpop.f32.mrb[0].mxu0
  %1043 = vmatprep.mubr.bf16.mxu0 0
  %1044 = vmatmul.mubr.bf16.gmra.mrb[0].mxu0 %v882
  %v1045 = vpop.f32.mrb[0].mxu0
  %v1046 = vadd.f32 %v913, %v1045
  %v1047 = vpop.f32.mrb[0].mxu0
  %v1048 = vpop.f32.mrb[0].mxu0
  %v1049 = vadd.f32 %v913, %v1048
  %v1050 = vpop.f32.mrb[0].mxu0
  %1051 = vmatprep.mubr.bf16.mxu0 0
  %1052 = vmatmul.mubr.bf16.gmra.mrb[0].mxu0 %v883
  %v1053 = vpop.f32.mrb[0].mxu0
  %v1054 = vadd.f32 %v913, %v1053
  %v1055 = vpop.f32.mrb[0].mxu0
  %v1056 = vpop.f32.mrb[0].mxu0
  %v1057 = vadd.f32 %v913, %v1056
  %v1058 = vpop.f32.mrb[0].mxu0
  %1059 = vmatprep.mubr.bf16.mxu0 0
  %1060 = vmatmul.mubr.bf16.gmra.mrb[0].mxu0 %v884
  %v1061 = vpop.f32.mrb[0].mxu0
  %v1062 = vadd.f32 %v913, %v1061
  %v1063 = vpop.f32.mrb[0].mxu0
  %v1064 = vpop.f32.mrb[0].mxu0
  %v1065 = vadd.f32 %v913, %v1064
  %v1066 = vpop.f32.mrb[0].mxu0
  %1067 = vmatprep.mubr.bf16.mxu0 0
  %1068 = vmatmul.mubr.bf16.gmra.mrb[0].mxu0 %v885
  %v1069 = vpop.f32.mrb[0].mxu0
  %v1070 = vadd.f32 %v913, %v1069
  %v1071 = vpop.f32.mrb[0].mxu0
  %v1072 = vpop.f32.mrb[0].mxu0
  %v1073 = vadd.f32 %v913, %v1072
  %v1074 = vpop.f32.mrb[0].mxu0
  %1075 = vmatprep.mubr.bf16.mxu0 0
  %1076 = vmatmul.mubr.bf16.gmra.mrb[0].mxu0 %v886
  %v1077 = vpop.f32.mrb[0].mxu0
  %v1078 = vadd.f32 %v913, %v1077
  %v1079 = vpop.f32.mrb[0].mxu0
  %v1080 = vpop.f32.mrb[0].mxu0
  %v1081 = vadd.f32 %v913, %v1080
  %v1082 = vpop.f32.mrb[0].mxu0
  %1083 = vmatprep.mubr.bf16.mxu0 0
  %1084 = vmatmul.mubr.bf16.gmra.mrb[0].mxu0 %v887
  %v1085 = vpop.f32.mrb[0].mxu0
  %v1086 = vadd.f32 %v913, %v1085
  %v1087 = vpop.f32.mrb[0].mxu0
  %v1088 = vpop.f32.mrb[0].mxu0
  %v1089 = vadd.f32 %v913, %v1088
  %v1090 = vpop.f32.mrb[0].mxu0
  %1091 = vmatprep.mubr.bf16.mxu0 0
  %1092 = vmatmul.mubr.bf16.gmra.mrb[0].mxu0 %v888
  %v1093 = vpop.f32.mrb[0].mxu0
  %v1094 = vadd.f32 %v913, %v1093
  %v1095 = vpop.f32.mrb[0].mxu0
  %v1096 = vpop.f32.mrb[0].mxu0
  %v1097 = vadd.f32 %v913, %v1096
  %v1098 = vpop.f32.mrb[0].mxu0
  %1099 = vmatprep.mubr.bf16.mxu0 0
  %1100 = vmatmul.mubr.bf16.gmra.mrb[0].mxu0 %v889
  %v1101 = vpop.f32.mrb[0].mxu0
  %v1102 = vadd.f32 %v913, %v1101
  %v1103 = vpop.f32.mrb[0].mxu0
  %v1104 = vpop.f32.mrb[0].mxu0
  %v1105 = vadd.f32 %v913, %v1104
  %v1106 = vpop.f32.mrb[0].mxu0
  %1107 = vmatprep.mubr.bf16.mxu0 0
  %1108 = vmatmul.mubr.bf16.gmra.mrb[0].mxu0 %v890
  %v1109 = vpop.f32.mrb[0].mxu0
  %v1110 = vadd.f32 %v913, %v1109
  %v1111 = vpop.f32.mrb[0].mxu0
  %v1112 = vpop.f32.mrb[0].mxu0
  %v1113 = vadd.f32 %v913, %v1112
  %v1114 = vpop.f32.mrb[0].mxu0
  %1115 = vmatprep.mubr.bf16.mxu0 0
  %1116 = vmatmul.mubr.bf16.gmra.mrb[0].mxu0 %v891
  %v1117 = vpop.f32.mrb[0].mxu0
  %v1118 = vadd.f32 %v913, %v1117
  %v1119 = vpop.f32.mrb[0].mxu0
  %v1120 = vpop.f32.mrb[0].mxu0
  %v1121 = vadd.f32 %v913, %v1120
  %v1122 = vpop.f32.mrb[0].mxu0
  %1123 = vdwg.mxu0
  %v1124 = vxor.u32 %v998, 2147483648
  %v1125 = vxor.u32 %v1001, 2147483648
  %v1126 = vxor.u32 %v1006, 2147483648
  %v1127 = vxor.u32 %v1009, 2147483648
  %v1128 = vxor.u32 %v1014, 2147483648
  %v1129 = vxor.u32 %v1017, 2147483648
  %v1130 = vxor.u32 %v1022, 2147483648
  %v1131 = vxor.u32 %v1025, 2147483648
  %v1132 = vxor.u32 %v1030, 2147483648
  %v1133 = vxor.u32 %v1033, 2147483648
  %v1134 = vxor.u32 %v1038, 2147483648
  %v1135 = vxor.u32 %v1041, 2147483648
  %v1136 = vxor.u32 %v1046, 2147483648
  %v1137 = vxor.u32 %v1049, 2147483648
  %v1138 = vxor.u32 %v1054, 2147483648
  %v1139 = vxor.u32 %v1057, 2147483648
  %v1140 = vxor.u32 %v1062, 2147483648
  %v1141 = vxor.u32 %v1065, 2147483648
  %v1142 = vxor.u32 %v1070, 2147483648
  %v1143 = vxor.u32 %v1073, 2147483648
  %v1144 = vxor.u32 %v1078, 2147483648
  %v1145 = vxor.u32 %v1081, 2147483648
  %v1146 = vxor.u32 %v1086, 2147483648
  %v1147 = vxor.u32 %v1089, 2147483648
  %v1148 = vxor.u32 %v1094, 2147483648
  %v1149 = vxor.u32 %v1097, 2147483648
  %v1150 = vxor.u32 %v1102, 2147483648
  %v1151 = vxor.u32 %v1105, 2147483648
  %v1152 = vxor.u32 %v1110, 2147483648
  %v1153 = vxor.u32 %v1113, 2147483648
  %v1154 = vxor.u32 %v1118, 2147483648
  %v1155 = vxor.u32 %v1121, 2147483648
  %v1156 = vmul.f32 %v1124, 1.442695
  %v1157 = vpow.pop %v1156
  %v1158 = vmul.f32 %v1125, 1.442695
  %v1159 = vpow.pop %v1158
  %v1160 = vmul.f32 %v1126, 1.442695
  %v1161 = vpow.pop %v1160
  %v1162 = vmul.f32 %v1127, 1.442695
  %v1163 = vpow.pop %v1162
  %v1164 = vmul.f32 %v1128, 1.442695
  %v1165 = vpow.pop %v1164
  %v1166 = vmul.f32 %v1129, 1.442695
  %v1167 = vpow.pop %v1166
  %v1168 = vmul.f32 %v1130, 1.442695
  %v1169 = vpow.pop %v1168
  %v1170 = vmul.f32 %v1131, 1.442695
  %v1171 = vpow.pop %v1170
  %v1172 = vmul.f32 %v1132, 1.442695
  %v1173 = vpow.pop %v1172
  %v1174 = vmul.f32 %v1133, 1.442695
  %v1175 = vpow.pop %v1174
  %v1176 = vmul.f32 %v1134, 1.442695
  %v1177 = vpow.pop %v1176
  %v1178 = vmul.f32 %v1135, 1.442695
  %v1179 = vpow.pop %v1178
  %v1180 = vmul.f32 %v1136, 1.442695
  %v1181 = vpow.pop %v1180
  %v1182 = vmul.f32 %v1137, 1.442695
  %v1183 = vpow.pop %v1182
  %v1184 = vmul.f32 %v1138, 1.442695
  %v1185 = vpow.pop %v1184
  %v1186 = vmul.f32 %v1139, 1.442695
  %v1187 = vpow.pop %v1186
  %v1188 = vmul.f32 %v1140, 1.442695
  %v1189 = vpow.pop %v1188
  %v1190 = vmul.f32 %v1141, 1.442695
  %v1191 = vpow.pop %v1190
  %v1192 = vmul.f32 %v1142, 1.442695
  %v1193 = vpow.pop %v1192
  %v1194 = vmul.f32 %v1143, 1.442695
  %v1195 = vpow.pop %v1194
  %v1196 = vmul.f32 %v1144, 1.442695
  %v1197 = vpow.pop %v1196
  %v1198 = vmul.f32 %v1145, 1.442695
  %v1199 = vpow.pop %v1198
  %v1200 = vmul.f32 %v1146, 1.442695
  %v1201 = vpow.pop %v1200
  %v1202 = vmul.f32 %v1147, 1.442695
  %v1203 = vpow.pop %v1202
  %v1204 = vmul.f32 %v1148, 1.442695
  %v1205 = vpow.pop %v1204
  %v1206 = vmul.f32 %v1149, 1.442695
  %v1207 = vpow.pop %v1206
  %v1208 = vmul.f32 %v1150, 1.442695
  %v1209 = vpow.pop %v1208
  %v1210 = vmul.f32 %v1151, 1.442695
  %v1211 = vpow.pop %v1210
  %v1212 = vmul.f32 %v1152, 1.442695
  %v1213 = vpow.pop %v1212
  %v1214 = vmul.f32 %v1153, 1.442695
  %v1215 = vpow.pop %v1214
  %v1216 = vmul.f32 %v1154, 1.442695
  %v1217 = vpow.pop %v1216
  %v1218 = vmul.f32 %v1155, 1.442695
  %v1219 = vpow.pop %v1218
  %v1220 = vadd.f32 %v1157, 1.0
  %v1221 = vadd.f32 %v1159, 1.0
  %v1222 = vadd.f32 %v1161, 1.0
  %v1223 = vadd.f32 %v1163, 1.0
  %v1224 = vadd.f32 %v1165, 1.0
  %v1225 = vadd.f32 %v1167, 1.0
  %v1226 = vadd.f32 %v1169, 1.0
  %v1227 = vadd.f32 %v1171, 1.0
  %v1228 = vadd.f32 %v1173, 1.0
  %v1229 = vadd.f32 %v1175, 1.0
  %v1230 = vadd.f32 %v1177, 1.0
  %v1231 = vadd.f32 %v1179, 1.0
  %v1232 = vadd.f32 %v1181, 1.0
  %v1233 = vadd.f32 %v1183, 1.0
  %v1234 = vadd.f32 %v1185, 1.0
  %v1235 = vadd.f32 %v1187, 1.0
  %v1236 = vadd.f32 %v1189, 1.0
  %v1237 = vadd.f32 %v1191, 1.0
  %v1238 = vadd.f32 %v1193, 1.0
  %v1239 = vadd.f32 %v1195, 1.0
  %v1240 = vadd.f32 %v1197, 1.0
  %v1241 = vadd.f32 %v1199, 1.0
  %v1242 = vadd.f32 %v1201, 1.0
  %v1243 = vadd.f32 %v1203, 1.0
  %v1244 = vadd.f32 %v1205, 1.0
  %v1245 = vadd.f32 %v1207, 1.0
  %v1246 = vadd.f32 %v1209, 1.0
  %v1247 = vadd.f32 %v1211, 1.0
  %v1248 = vadd.f32 %v1213, 1.0
  %v1249 = vadd.f32 %v1215, 1.0
  %v1250 = vadd.f32 %v1217, 1.0
  %v1251 = vadd.f32 %v1219, 1.0
  %v1252 = vrcp.pop %v1220
  %v1253 = vmul.f32 1.0, %v1252
  %v1254 = vrcp.pop %v1221
  %v1255 = vmul.f32 1.0, %v1254
  %v1256 = vrcp.pop %v1222
  %v1257 = vmul.f32 1.0, %v1256
  %v1258 = vrcp.pop %v1223
  %v1259 = vmul.f32 1.0, %v1258
  %v1260 = vrcp.pop %v1224
  %v1261 = vmul.f32 1.0, %v1260
  %v1262 = vrcp.pop %v1225
  %v1263 = vmul.f32 1.0, %v1262
  %v1264 = vrcp.pop %v1226
  %v1265 = vmul.f32 1.0, %v1264
  %v1266 = vrcp.pop %v1227
  %v1267 = vmul.f32 1.0, %v1266
  %v1268 = vrcp.pop %v1228
  %v1269 = vmul.f32 1.0, %v1268
  %v1270 = vrcp.pop %v1229
  %v1271 = vmul.f32 1.0, %v1270
  %v1272 = vrcp.pop %v1230
  %v1273 = vmul.f32 1.0, %v1272
  %v1274 = vrcp.pop %v1231
  %v1275 = vmul.f32 1.0, %v1274
  %v1276 = vrcp.pop %v1232
  %v1277 = vmul.f32 1.0, %v1276
  %v1278 = vrcp.pop %v1233
  %v1279 = vmul.f32 1.0, %v1278
  %v1280 = vrcp.pop %v1234
  %v1281 = vmul.f32 1.0, %v1280
  %v1282 = vrcp.pop %v1235
  %v1283 = vmul.f32 1.0, %v1282
  %v1284 = vrcp.pop %v1236
  %v1285 = vmul.f32 1.0, %v1284
  %v1286 = vrcp.pop %v1237
  %v1287 = vmul.f32 1.0, %v1286
  %v1288 = vrcp.pop %v1238
  %v1289 = vmul.f32 1.0, %v1288
  %v1290 = vrcp.pop %v1239
  %v1291 = vmul.f32 1.0, %v1290
  %v1292 = vrcp.pop %v1240
  %v1293 = vmul.f32 1.0, %v1292
  %v1294 = vrcp.pop %v1241
  %v1295 = vmul.f32 1.0, %v1294
  %v1296 = vrcp.pop %v1242
  %v1297 = vmul.f32 1.0, %v1296
  %v1298 = vrcp.pop %v1243
  %v1299 = vmul.f32 1.0, %v1298
  %v1300 = vrcp.pop %v1244
  %v1301 = vmul.f32 1.0, %v1300
  %v1302 = vrcp.pop %v1245
  %v1303 = vmul.f32 1.0, %v1302
  %v1304 = vrcp.pop %v1246
  %v1305 = vmul.f32 1.0, %v1304
  %v1306 = vrcp.pop %v1247
  %v1307 = vmul.f32 1.0, %v1306
  %v1308 = vrcp.pop %v1248
  %v1309 = vmul.f32 1.0, %v1308
  %v1310 = vrcp.pop %v1249
  %v1311 = vmul.f32 1.0, %v1310
  %v1312 = vrcp.pop %v1250
  %v1313 = vmul.f32 1.0, %v1312
  %v1314 = vrcp.pop %v1251
  %v1315 = vmul.f32 1.0, %v1314
  %vm1316 = vcmask 64512
  %1317 = vst.msk [vmem:[%s7] sm:$0xff] %vm1316, %v1253
  %1318 = vst.msk [vmem:[%s7 + $0x8] sm:$0xff] %vm1316, %v1255
  %1319 = vst.msk [vmem:[%s7 + $0x10] sm:$0xff] %vm1316, %v1257
  %1320 = vst.msk [vmem:[%s7 + $0x18] sm:$0xff] %vm1316, %v1259
  %1321 = vst.msk [vmem:[%s7 + $0x20] sm:$0xff] %vm1316, %v1261
  %1322 = vst.msk [vmem:[%s7 + $0x28] sm:$0xff] %vm1316, %v1263
  %1323 = vst.msk [vmem:[%s7 + $0x30] sm:$0xff] %vm1316, %v1265
  %1324 = vst.msk [vmem:[%s7 + $0x38] sm:$0xff] %vm1316, %v1267
  %1325 = vst.msk [vmem:[%s7 + $0x40] sm:$0xff] %vm1316, %v1269
  %1326 = vst.msk [vmem:[%s7 + $0x48] sm:$0xff] %vm1316, %v1271
  %1327 = vst.msk [vmem:[%s7 + $0x50] sm:$0xff] %vm1316, %v1273
  %1328 = vst.msk [vmem:[%s7 + $0x58] sm:$0xff] %vm1316, %v1275
  %1329 = vst.msk [vmem:[%s7 + $0x60] sm:$0xff] %vm1316, %v1277
  %1330 = vst.msk [vmem:[%s7 + $0x68] sm:$0xff] %vm1316, %v1279
  %1331 = vst.msk [vmem:[%s7 + $0x70] sm:$0xff] %vm1316, %v1281
  %1332 = vst.msk [vmem:[%s7 + $0x78] sm:$0xff] %vm1316, %v1283
  %1333 = vst.msk [vmem:[%s7 + $0x80] sm:$0xff] %vm1316, %v1285
  %1334 = vst.msk [vmem:[%s7 + $0x88] sm:$0xff] %vm1316, %v1287
  %1335 = vst.msk [vmem:[%s7 + $0x90] sm:$0xff] %vm1316, %v1289
  %1336 = vst.msk [vmem:[%s7 + $0x98] sm:$0xff] %vm1316, %v1291
  %1337 = vst.msk [vmem:[%s7 + $0xa0] sm:$0xff] %vm1316, %v1293
  %1338 = vst.msk [vmem:[%s7 + $0xa8] sm:$0xff] %vm1316, %v1295
  %1339 = vst.msk [vmem:[%s7 + $0xb0] sm:$0xff] %vm1316, %v1297
  %1340 = vst.msk [vmem:[%s7 + $0xb8] sm:$0xff] %vm1316, %v1299
  %1341 = vst.msk [vmem:[%s7 + $0xc0] sm:$0xff] %vm1316, %v1301
  %1342 = vst.msk [vmem:[%s7 + $0xc8] sm:$0xff] %vm1316, %v1303
  %1343 = vst.msk [vmem:[%s7 + $0xd0] sm:$0xff] %vm1316, %v1305
  %1344 = vst.msk [vmem:[%s7 + $0xd8] sm:$0xff] %vm1316, %v1307
  %1345 = vst.msk [vmem:[%s7 + $0xe0] sm:$0xff] %vm1316, %v1309
  %1346 = vst.msk [vmem:[%s7 + $0xe8] sm:$0xff] %vm1316, %v1311
  %1347 = vst.msk [vmem:[%s7 + $0xf0] sm:$0xff] %vm1316, %v1313
  %1348 = vst.msk [vmem:[%s7 + $0xf8] sm:$0xff] %vm1316, %v1315
  // Predicated region
  $region30: #{tpu_custom_call.1} parent=0 // pred_check
    _
  $region31: #{tpu_custom_call.1} parent=0 // pred_check_branch
    %1350 = sbr.rel (0) target = $region33
  $region32: #{tpu_custom_call.1} parent=0 // pred_region
    _
  $region33: #{tpu_custom_call.1} parent=0 // pred_fallthru
    _
  // Predicated region
  $region34: #{tpu_custom_call.1} parent=0 // pred_check
    _
  $region35: #{tpu_custom_call.1} parent=0 // pred_check_branch
    %1352 = sbr.rel (0) target = $region37
  $region36: #{tpu_custom_call.1} parent=0 // pred_region
    _
  $region37: #{tpu_custom_call.1} parent=0 // pred_fallthru
    _

</llo_original>
